<compile_context>
chip_gen: v5e
topology: v5e:2x2
jax: 0.10.0
libtpu: 0.0.40
codegen_flags: <defaults>
</compile_context>

<pallas_src>
import jax
import jax.numpy as jnp
from jax.experimental import pallas as pl
from jax.experimental.pallas import tpu as pltpu

BN_EPS = 1e-5
_LANES = 128
_MAX_TB = 512   # batch tile cap, sized against v7x VMEM (64 MiB phys / 32 MiB scoped)


def _round_up(n, m):
    return ((n + m - 1) // m) * m


# ---------------------------------------------------------------------------
# kernel
# ---------------------------------------------------------------------------
def mlp_kernel(x_ref,
               w1_ref, b1_ref,
               w2_ref, b2_ref,
               w3_ref, b3_ref,
               w4_ref, b4_ref,
               o_ref):
    """One batch tile of the MLP forward; weights stay VMEM-resident across the grid."""
    # x arrives f32; cast to bf16 in-kernel for MXU-rate matmuls.
    x = x_ref[...].astype(jnp.bfloat16)                                  # (TB, D_in)

    # hidden layer 1: Linear + folded BatchNorm, then ReLU (Dropout = identity)
    h = jnp.dot(x, w1_ref[...], preferred_element_type=jnp.float32) + b1_ref[...]
    h = jnp.maximum(h, 0.0)

    # hidden layer 2
    h = jnp.dot(h.astype(jnp.bfloat16), w2_ref[...],
                preferred_element_type=jnp.float32) + b2_ref[...]
    h = jnp.maximum(h, 0.0)

    # hidden layer 3 (output dim zero-padded to a lane-full multiple of 128)
    h = jnp.dot(h.astype(jnp.bfloat16), w3_ref[...],
                preferred_element_type=jnp.float32) + b3_ref[...]
    h = jnp.maximum(h, 0.0)

    # final Linear(H3, 1): VPU multiply + XLU lane reduction; b4 is an SMEM scalar.
    pred = jnp.sum(h * w4_ref[...], axis=-1, keepdims=True) + b4_ref[0]
    o_ref[...] = pred                                                    # (TB, 1) f32


# ---------------------------------------------------------------------------
# one-time (model-load) parameter folding — kept OUT of the jitted per-call path
# ---------------------------------------------------------------------------
def fold_params(params):
    """Fold BatchNorm running stats + Linear bias into bf16 weights / f32 biases."""
    def fold(w, b, gamma, beta, rmean, rvar):
        s = gamma / jnp.sqrt(rvar + BN_EPS)            # (1, H)
        t = beta - rmean * s                           # (1, H)
        w_f = (w * s).astype(jnp.bfloat16)             # column-wise scale, bf16 weights
        b_f = (b * s + t).astype(jnp.float32)          # f32 bias (epilogue stays f32)
        return w_f, b_f

    w1, b1 = fold(params["w1"], params["b1"], params["g1"], params["be1"],
                  params["m1"], params["v1"])
    w2, b2 = fold(params["w2"], params["b2"], params["g2"], params["be2"],
                  params["m2"], params["v2"])
    w3, b3 = fold(params["w3"], params["b3"], params["g3"], params["be3"],
                  params["m3"], params["v3"])

    H3 = w3.shape[1]
    H3P = _round_up(H3, _LANES)
    w4_row = params["w4"].reshape(1, H3).astype(jnp.float32)            # (1, H3)
    b4 = params["b4"].reshape(1).astype(jnp.float32)                    # (1,) SMEM scalar

    # Zero-pad the last hidden dim to lane width: relu(0) = 0 and the padded w4
    # columns are 0, so the result is numerically identical.
    if H3P != H3:
        pad = H3P - H3
        w3 = jnp.pad(w3, ((0, 0), (0, pad)))
        b3 = jnp.pad(b3, ((0, 0), (0, pad)))
        w4_row = jnp.pad(w4_row, ((0, 0), (0, pad)))

    return (w1, b1, w2, b2, w3, b3, w4_row, b4)


def _pick_batch_tile(B):
    """Largest MXU/VMEM-friendly tile <= _MAX_TB that divides B (fallback: whole B)."""
    if B <= _MAX_TB:
        return B
    for tb in (_MAX_TB, 256, 128, 64, 32, 16, 8):
        if B % tb == 0:
            return tb
    return B


# ---------------------------------------------------------------------------
# jitted forward: takes pre-folded weights
# ---------------------------------------------------------------------------
def improved_nn_forward(x, folded):
    """x: (B, D_in) f32.  folded: output of fold_params() cached at model-load time."""
    w1, b1, w2, b2, w3, b3, w4, b4 = folded
    B, D_in = x.shape
    H1, H2, H3P = w1.shape[1], w2.shape[1], w3.shape[1]

    TB = _pick_batch_tile(B)

    grid_spec = pl.GridSpec(
        grid=(pl.cdiv(B, TB),),
        in_specs=[
            # x / out tiled over batch; weights keep a constant block index so
            # they stay VMEM-resident and are not re-DMA'd per grid step.
            pl.BlockSpec((TB, D_in), lambda i: (i, 0)),     # x
            pl.BlockSpec((D_in, H1), lambda i: (0, 0)),     # w1'
            pl.BlockSpec((1, H1),    lambda i: (0, 0)),     # b1'
            pl.BlockSpec((H1, H2),   lambda i: (0, 0)),     # w2'
            pl.BlockSpec((1, H2),    lambda i: (0, 0)),     # b2'
            pl.BlockSpec((H2, H3P),  lambda i: (0, 0)),     # w3' (padded)
            pl.BlockSpec((1, H3P),   lambda i: (0, 0)),     # b3' (padded)
            pl.BlockSpec((1, H3P),   lambda i: (0, 0)),     # w4 row (padded)
            pl.BlockSpec(memory_space=pltpu.MemorySpace.SMEM),  # b4 scalar
        ],
        out_specs=pl.BlockSpec((TB, 1), lambda i: (i, 0)),
    )

    return pl.pallas_call(
        mlp_kernel,
        out_shape=jax.ShapeDtypeStruct((B, 1), jnp.float32),
        grid_spec=grid_spec,
        compiler_params=pltpu.CompilerParams(
            # batch axis is embarrassingly parallel -> shard across both v7x
            # TensorCores; harmless on single-TC v5e/v6e.
            dimension_semantics=("parallel",)),
    )(x, w1, b1, w2, b2, w3, b3, w4, b4)


# ---------------------------------------------------------------------------
# deterministic parameter construction (mirrors __init__ / _init_weights shapes)
# ---------------------------------------------------------------------------
def xavier_uniform(key, fan_in, fan_out):
    bound = jnp.sqrt(6.0 / (fan_in + fan_out))
    return jax.random.uniform(key, (fan_in, fan_out), jnp.float32, -bound, bound)


def make_params(key, input_size, hidden_sizes):
    dims = [input_size] + list(hidden_sizes)
    params = {}
    keys = jax.random.split(key, 32)
    ki = 0
    for layer in range(3):
        d_in, d_out = dims[layer], dims[layer + 1]
        i = layer + 1
        # Linear: xavier_uniform weight, zero bias (as in _init_weights)
        params[f"w{i}"] = xavier_uniform(keys[ki], d_in, d_out); ki += 1
        params[f"b{i}"] = jnp.zeros((1, d_out), jnp.float32)
        # BatchNorm1d eval-mode params (non-trivial, deterministic)
        params[f"g{i}"] = 1.0 + 0.1 * jax.random.normal(keys[ki], (1, d_out)); ki += 1
        params[f"be{i}"] = 0.1 * jax.random.normal(keys[ki], (1, d_out)); ki += 1
        params[f"m{i}"] = 0.1 * jax.random.normal(keys[ki], (1, d_out)); ki += 1
        params[f"v{i}"] = jnp.abs(jax.random.normal(keys[ki], (1, d_out))) + 0.5; ki += 1
    # final Linear(hidden_sizes[-1], 1)
    params["w4"] = xavier_uniform(keys[ki], dims[-1], 1); ki += 1
    params["b4"] = jnp.zeros((1, 1), jnp.float32)
    return params


def reference_forward(x, params):
    """Pure-JAX f32 reference of the eval-mode ImprovedNeuralNetwork forward."""
    h = x
    for i in (1, 2, 3):
        z = h @ params[f"w{i}"] + params[f"b{i}"]
        z = (z - params[f"m{i}"]) / jnp.sqrt(params[f"v{i}"] + BN_EPS)
        z = z * params[f"g{i}"] + params[f"be{i}"]
        h = jnp.maximum(z, 0.0)                       # Dropout = identity (eval)
    return h @ params["w4"] + params["b4"]            # (B, 1)


def _check_close(out, ref, tol=5e-2):
    # bf16 weights / matmul inputs -> compare max error against output scale.
    scale = jnp.maximum(jnp.max(jnp.abs(ref)), 1.0)
    err = jnp.max(jnp.abs(out - ref)) / scale
    assert float(err) < tol, (float(err), tol)


if __name__ == "__main__":
    D_IN = 32
    HIDDEN = [256, 128, 64]

    key = jax.random.PRNGKey(0)
    k_x, k_x2, k_p = jax.random.split(key, 3)
    params = make_params(k_p, D_IN, HIDDEN)

    # BN fold + bf16 cast done ONCE at model-load time; reused for every call.
    folded = fold_params(params)
    fwd = jax.jit(improved_nn_forward)

    # small batch (single grid step)
    x_small = jax.random.normal(k_x, (8, D_IN), jnp.float32)
    out_small = jax.block_until_ready(fwd(x_small, folded))
    assert out_small.shape == (8, 1)
    _check_close(out_small, reference_forward(x_small, params))

    # larger batch exercising the batch-tiled, double-buffered grid (TB=512, grid=(2,))
    x_big = jax.random.normal(k_x2, (1024, D_IN), jnp.float32)
    out_big = jax.block_until_ready(fwd(x_big, folded))
    assert out_big.shape == (1024, 1)
    _check_close(out_big, reference_forward(x_big, params))

    print("KERNEL_OK")
</pallas_src>

<mosaic_0001>
module attributes {stable_mosaic.version = 11 : i64} {
  func.func @mlp_kernel(%arg0: i32, %arg1: memref<8x32xf32, #tpu.memory_space<vmem>>, %arg2: memref<32x256xbf16, #tpu.memory_space<vmem>>, %arg3: memref<1x256xf32, #tpu.memory_space<vmem>>, %arg4: memref<256x128xbf16, #tpu.memory_space<vmem>>, %arg5: memref<1x128xf32, #tpu.memory_space<vmem>>, %arg6: memref<128x128xbf16, #tpu.memory_space<vmem>>, %arg7: memref<1x128xf32, #tpu.memory_space<vmem>>, %arg8: memref<1x128xf32, #tpu.memory_space<vmem>>, %arg9: memref<1xf32, #tpu.memory_space<smem>>, %arg10: memref<8x1xf32, #tpu.memory_space<vmem>>) attributes {dimension_semantics = [#tpu.dimension_semantics<parallel>], iteration_bounds = array<i64: 1>, scalar_prefetch = 0 : i64, scratch_operands = 0 : i64, tpu.core_type = #tpu.core_type<tc>, window_params = [{transform_indices = @transform_0, window_bounds = array<i64: 8, 32>}, {pipeline_mode = #tpu.pipeline_mode<synchronous>, transform_indices = @transform_1, window_bounds = array<i64: 32, 256>}, {pipeline_mode = #tpu.pipeline_mode<synchronous>, transform_indices = @transform_2, window_bounds = array<i64: 1, 256>}, {pipeline_mode = #tpu.pipeline_mode<synchronous>, transform_indices = @transform_3, window_bounds = array<i64: 256, 128>}, {pipeline_mode = #tpu.pipeline_mode<synchronous>, transform_indices = @transform_4, window_bounds = array<i64: 1, 128>}, {pipeline_mode = #tpu.pipeline_mode<synchronous>, transform_indices = @transform_5, window_bounds = array<i64: 128, 128>}, {pipeline_mode = #tpu.pipeline_mode<synchronous>, transform_indices = @transform_6, window_bounds = array<i64: 1, 128>}, {pipeline_mode = #tpu.pipeline_mode<synchronous>, transform_indices = @transform_7, window_bounds = array<i64: 1, 128>}, {transform_indices = @transform_8, window_bounds = array<i64: 1>}, {transform_indices = @transform_9, window_bounds = array<i64: 8, 1>}]} {
    %c0 = arith.constant 0 : index
    %c0_0 = arith.constant 0 : index
    %0 = vector.load %arg1[%c0, %c0_0] : memref<8x32xf32, #tpu.memory_space<vmem>>, vector<8x32xf32>
    %1 = arith.truncf %0 : vector<8x32xf32> to vector<8x32xbf16>
    %c0_1 = arith.constant 0 : index
    %c0_2 = arith.constant 0 : index
    %2 = vector.load %arg2[%c0_1, %c0_2] : memref<32x256xbf16, #tpu.memory_space<vmem>>, vector<32x256xbf16>
    %cst = arith.constant dense<0.000000e+00> : vector<8x256xf32>
    %3 = tpu.matmul %1, %2, %cst {dimension_numbers = #tpu.dot_dimension_numbers<[1], [0], [0], [1], [0, 0, 1, 1], [], []>} : vector<8x32xbf16>, vector<32x256xbf16>, vector<8x256xf32> -> vector<8x256xf32>
    %c0_3 = arith.constant 0 : index
    %c0_4 = arith.constant 0 : index
    %4 = vector.load %arg3[%c0_3, %c0_4] : memref<1x256xf32, #tpu.memory_space<vmem>>, vector<1x256xf32>
    %5 = vector.broadcast %4 : vector<1x256xf32> to vector<8x256xf32>
    %6 = arith.addf %3, %5 : vector<8x256xf32>
    %cst_5 = arith.constant 0.000000e+00 : f32
    %7 = vector.broadcast %cst_5 : f32 to vector<8x256xf32>
    %8 = arith.maximumf %6, %7 : vector<8x256xf32>
    %9 = arith.truncf %8 : vector<8x256xf32> to vector<8x256xbf16>
    %c0_6 = arith.constant 0 : index
    %c0_7 = arith.constant 0 : index
    %10 = vector.load %arg4[%c0_6, %c0_7] : memref<256x128xbf16, #tpu.memory_space<vmem>>, vector<256x128xbf16>
    %cst_8 = arith.constant dense<0.000000e+00> : vector<8x128xf32>
    %11 = tpu.matmul %9, %10, %cst_8 {dimension_numbers = #tpu.dot_dimension_numbers<[1], [0], [0], [1], [0, 0, 1, 1], [], []>} : vector<8x256xbf16>, vector<256x128xbf16>, vector<8x128xf32> -> vector<8x128xf32>
    %c0_9 = arith.constant 0 : index
    %c0_10 = arith.constant 0 : index
    %12 = vector.load %arg5[%c0_9, %c0_10] : memref<1x128xf32, #tpu.memory_space<vmem>>, vector<1x128xf32>
    %13 = vector.broadcast %12 : vector<1x128xf32> to vector<8x128xf32>
    %14 = arith.addf %11, %13 : vector<8x128xf32>
    %cst_11 = arith.constant 0.000000e+00 : f32
    %15 = vector.broadcast %cst_11 : f32 to vector<8x128xf32>
    %16 = arith.maximumf %14, %15 : vector<8x128xf32>
    %17 = arith.truncf %16 : vector<8x128xf32> to vector<8x128xbf16>
    %c0_12 = arith.constant 0 : index
    %c0_13 = arith.constant 0 : index
    %18 = vector.load %arg6[%c0_12, %c0_13] : memref<128x128xbf16, #tpu.memory_space<vmem>>, vector<128x128xbf16>
    %cst_14 = arith.constant dense<0.000000e+00> : vector<8x128xf32>
    %19 = tpu.matmul %17, %18, %cst_14 {dimension_numbers = #tpu.dot_dimension_numbers<[1], [0], [0], [1], [0, 0, 1, 1], [], []>} : vector<8x128xbf16>, vector<128x128xbf16>, vector<8x128xf32> -> vector<8x128xf32>
    %c0_15 = arith.constant 0 : index
    %c0_16 = arith.constant 0 : index
    %20 = vector.load %arg7[%c0_15, %c0_16] : memref<1x128xf32, #tpu.memory_space<vmem>>, vector<1x128xf32>
    %21 = vector.broadcast %20 : vector<1x128xf32> to vector<8x128xf32>
    %22 = arith.addf %19, %21 : vector<8x128xf32>
    %cst_17 = arith.constant 0.000000e+00 : f32
    %23 = vector.broadcast %cst_17 : f32 to vector<8x128xf32>
    %24 = arith.maximumf %22, %23 : vector<8x128xf32>
    %c0_18 = arith.constant 0 : index
    %c0_19 = arith.constant 0 : index
    %25 = vector.load %arg8[%c0_18, %c0_19] : memref<1x128xf32, #tpu.memory_space<vmem>>, vector<1x128xf32>
    %26 = vector.broadcast %25 : vector<1x128xf32> to vector<8x128xf32>
    %27 = arith.mulf %24, %26 : vector<8x128xf32>
    %cst_20 = arith.constant dense<0.000000e+00> : vector<8xf32>
    %28 = vector.multi_reduction <add>, %27, %cst_20 [1] : vector<8x128xf32> to vector<8xf32>
    %29 = vector.shape_cast %28 : vector<8xf32> to vector<8x1xf32>
    %c0_21 = arith.constant 0 : index
    %30 = memref.load %arg9[%c0_21] : memref<1xf32, #tpu.memory_space<smem>>
    %31 = vector.broadcast %30 : f32 to vector<8x1xf32>
    %32 = arith.addf %29, %31 : vector<8x1xf32>
    %c0_22 = arith.constant 0 : index
    %c0_23 = arith.constant 0 : index
    %33 = vector.load %arg10[%c0_22, %c0_23] : memref<8x1xf32, #tpu.memory_space<vmem>>, vector<8x1xf32>
    tpu.vector_store %arg10[%c0_22, %c0_23], %32 {strides = array<i32>} : memref<8x1xf32, #tpu.memory_space<vmem>>, vector<8x1xf32>,
    return
  }
  func.func @transform_0(%arg0: i32) -> (i32, i32) {
    %c0_i32 = arith.constant 0 : i32
    %c0_i32_0 = arith.constant 0 : i32
    return %arg0, %c0_i32 : i32, i32
  }
  func.func @transform_1(%arg0: i32) -> (i32, i32) {
    %c0_i32 = arith.constant 0 : i32
    %c0_i32_0 = arith.constant 0 : i32
    %c0_i32_1 = arith.constant 0 : i32
    return %c0_i32, %c0_i32_0 : i32, i32
  }
  func.func @transform_2(%arg0: i32) -> (i32, i32) {
    %c0_i32 = arith.constant 0 : i32
    %c0_i32_0 = arith.constant 0 : i32
    %c0_i32_1 = arith.constant 0 : i32
    return %c0_i32, %c0_i32_0 : i32, i32
  }
  func.func @transform_3(%arg0: i32) -> (i32, i32) {
    %c0_i32 = arith.constant 0 : i32
    %c0_i32_0 = arith.constant 0 : i32
    %c0_i32_1 = arith.constant 0 : i32
    return %c0_i32, %c0_i32_0 : i32, i32
  }
  func.func @transform_4(%arg0: i32) -> (i32, i32) {
    %c0_i32 = arith.constant 0 : i32
    %c0_i32_0 = arith.constant 0 : i32
    %c0_i32_1 = arith.constant 0 : i32
    return %c0_i32, %c0_i32_0 : i32, i32
  }
  func.func @transform_5(%arg0: i32) -> (i32, i32) {
    %c0_i32 = arith.constant 0 : i32
    %c0_i32_0 = arith.constant 0 : i32
    %c0_i32_1 = arith.constant 0 : i32
    return %c0_i32, %c0_i32_0 : i32, i32
  }
  func.func @transform_6(%arg0: i32) -> (i32, i32) {
    %c0_i32 = arith.constant 0 : i32
    %c0_i32_0 = arith.constant 0 : i32
    %c0_i32_1 = arith.constant 0 : i32
    return %c0_i32, %c0_i32_0 : i32, i32
  }
  func.func @transform_7(%arg0: i32) -> (i32, i32) {
    %c0_i32 = arith.constant 0 : i32
    %c0_i32_0 = arith.constant 0 : i32
    %c0_i32_1 = arith.constant 0 : i32
    return %c0_i32, %c0_i32_0 : i32, i32
  }
  func.func @transform_8(%arg0: i32) -> i32 {
    %c0_i32 = arith.constant 0 : i32
    %c0_i32_0 = arith.constant 0 : i32
    return %c0_i32 : i32
  }
  func.func @transform_9(%arg0: i32) -> (i32, i32) {
    %c0_i32 = arith.constant 0 : i32
    %c0_i32_0 = arith.constant 0 : i32
    return %arg0, %c0_i32 : i32, i32
  }
}

</mosaic_0001>

<llo_original>
// kernel: improved_nn_forward.1
$region0: #{improved_nn_forward.1}
  #allocation0 [shape = 'u32[]', space=smem, size = 0x4, offset = 0x4, fixed_abs, tag = 'smem constant byte address 0x4 - core index']
  #allocation1 [shape = 'u32[72,128]{1,0:T(1,128)}', space=vmem, size = 0x9000, scoped, tag = 'internal scratch']
  #allocation2 [shape = 'f32[1]{0:T(128)S(6)}', space=smem, size = 0x200, scoped, tag = 'scoped memory for improved_nn_forward.1']
  %s0 = inlined_call_operand.hbm [shape: f32[8,32], index: 0, kind: input, shape index: {}]
  %s1 = inlined_call_operand.hbm [shape: bf16[32,256], index: 1, kind: input, shape index: {}]
  %s2 = inlined_call_operand.vmem [shape: f32[1,256], index: 2, kind: input, shape index: {}]
  %s3 = inlined_call_operand.hbm [shape: bf16[256,128], index: 3, kind: input, shape index: {}]
  %s4 = inlined_call_operand.vmem [shape: f32[1,128], index: 4, kind: input, shape index: {}]
  %s5 = inlined_call_operand.hbm [shape: bf16[128,128], index: 5, kind: input, shape index: {}]
  %s6 = inlined_call_operand.vmem [shape: f32[1,128], index: 6, kind: input, shape index: {}]
  %s7 = inlined_call_operand.vmem [shape: f32[1,128], index: 7, kind: input, shape index: {}]
  %s8 = inlined_call_operand.<no memory space> [shape: f32[1], index: 8, kind: input, shape index: {}]
  %s9 = inlined_call_operand.vmem [shape: f32[8,1], index: 9, kind: output, shape index: {}]
  %s10 = sld [smem:[#allocation0]]
  $region62: #{improved_nn_forward.1} parent=0
    _
  %s12 = ssub.s32 1, %s10
  %s13 = scalar_select 0, %s12, %s10
  %14 = sst [smem:[#allocation2]] %s8
  $region1: #{improved_nn_forward.1} parent=0
    #allocation3 [shape = 'u8[4096]{0}', space=vmem, size = 0x1000, scoped, tag = 'input window, operand 0, single buffered']
    #allocation4 [shape = 's32[1]{0}', space=sflag, size = 0x4, scoped, tag = 'scoped memory for improved_nn_forward.1']
    #allocation5 [shape = 'u8[16384]{0}', space=vmem, size = 0x4000, scoped, tag = 'input window, operand 1, single buffered']
    #allocation6 [shape = 's32[1]{0}', space=sflag, size = 0x4, scoped, tag = 'scoped memory for improved_nn_forward.1']
    #allocation7 [shape = 'u8[65536]{0}', space=vmem, size = 0x10000, scoped, tag = 'input window, operand 3, single buffered']
    #allocation8 [shape = 'u8[32768]{0}', space=vmem, size = 0x8000, scoped, tag = 'input window, operand 5, single buffered']
    #allocation9 [shape = 's32[1]{0}', space=sflag, size = 0x4, scoped, tag = 'scoped memory for improved_nn_forward.1']
    %15 = vsyncpa [#allocation4], 0
    %16 = vsyncpa [#allocation6], 0
    %17 = vsyncpa [#allocation9], 0
    // Predicated region
    $region2: #{improved_nn_forward.1} parent=1 // pred_check
      _
    $region3: #{improved_nn_forward.1} parent=1 // pred_check_branch
      %19 = sbr.rel (0) target = $region5
    $region4: #{improved_nn_forward.1} parent=1 // pred_region
      %21 = vsyncadd [#allocation4], 0
      %s23 = sshll.u32 %s0, 4
      %s24 = int_to_ptr.hbm [resolvable:$true] %s23
      %s25 = sshll.u32 [#allocation3], 4
      %s26 = int_to_ptr.vmem [resolvable:$true] %s25
      %28 = dma.hbm_to_vmem [thread:$0]  %s24, 128, %s26, [#allocation4]
    $region5: #{improved_nn_forward.1} parent=1 // pred_fallthru
      _
    // Predicated region
    $region6: #{improved_nn_forward.1} parent=1 // pred_check
      _
    $region7: #{improved_nn_forward.1} parent=1 // pred_check_branch
      %30 = sbr.rel (0) target = $region9
    $region8: #{improved_nn_forward.1} parent=1 // pred_region
      %32 = vsyncadd [#allocation6], 0
      %s33 = sshll.u32 %s1, 4
      %s34 = int_to_ptr.hbm [resolvable:$true] %s33
      %s35 = sshll.u32 [#allocation5], 4
      %s36 = int_to_ptr.vmem [resolvable:$true] %s35
      %41 = dma.hbm_to_vmem [thread:$0]  %s34, 512, %s36, [#allocation6], 128, 128, 8
    $region9: #{improved_nn_forward.1} parent=1 // pred_fallthru
      _
    // Predicated region
    $region10: #{improved_nn_forward.1} parent=1 // pred_check
      _
    $region11: #{improved_nn_forward.1} parent=1 // pred_check_branch
      %43 = sbr.rel (0) target = $region13
    $region12: #{improved_nn_forward.1} parent=1 // pred_region
      _
    $region13: #{improved_nn_forward.1} parent=1 // pred_fallthru
      _
    // Predicated region
    $region14: #{improved_nn_forward.1} parent=1 // pred_check
      _
    $region15: #{improved_nn_forward.1} parent=1 // pred_check_branch
      %45 = sbr.rel (0) target = $region17
    $region16: #{improved_nn_forward.1} parent=1 // pred_region
      %47 = vsyncadd [#allocation6], 0
      %s48 = sshll.u32 %s3, 4
      %s49 = int_to_ptr.hbm [resolvable:$true] %s48
      %s50 = sshll.u32 [#allocation7], 4
      %s51 = int_to_ptr.vmem [resolvable:$true] %s50
      %56 = dma.hbm_to_vmem [thread:$0]  %s49, 2048, %s51, [#allocation6], 64, 64, 4
    $region17: #{improved_nn_forward.1} parent=1 // pred_fallthru
      _
    // Predicated region
    $region18: #{improved_nn_forward.1} parent=1 // pred_check
      _
    $region19: #{improved_nn_forward.1} parent=1 // pred_check_branch
      %58 = sbr.rel (0) target = $region21
    $region20: #{improved_nn_forward.1} parent=1 // pred_region
      _
    $region21: #{improved_nn_forward.1} parent=1 // pred_fallthru
      _
    // Predicated region
    $region22: #{improved_nn_forward.1} parent=1 // pred_check
      _
    $region23: #{improved_nn_forward.1} parent=1 // pred_check_branch
      %60 = sbr.rel (0) target = $region25
    $region24: #{improved_nn_forward.1} parent=1 // pred_region
      %62 = vsyncadd [#allocation9], 0
      %s63 = sshll.u32 %s5, 4
      %s64 = int_to_ptr.hbm [resolvable:$true] %s63
      %s65 = sshll.u32 [#allocation8], 4
      %s66 = int_to_ptr.vmem [resolvable:$true] %s65
      %71 = dma.hbm_to_vmem [thread:$0]  %s64, 1024, %s66, [#allocation9], 64, 64, 4
    $region25: #{improved_nn_forward.1} parent=1 // pred_fallthru
      _
    // Predicated region
    $region26: #{improved_nn_forward.1} parent=1 // pred_check
      _
    $region27: #{improved_nn_forward.1} parent=1 // pred_check_branch
      %73 = sbr.rel (0) target = $region29
    $region28: #{improved_nn_forward.1} parent=1 // pred_region
      _
    $region29: #{improved_nn_forward.1} parent=1 // pred_fallthru
      _
    // Predicated region
    $region30: #{improved_nn_forward.1} parent=1 // pred_check
      _
    $region31: #{improved_nn_forward.1} parent=1 // pred_check_branch
      %75 = sbr.rel (0) target = $region33
    $region32: #{improved_nn_forward.1} parent=1 // pred_region
      _
    $region33: #{improved_nn_forward.1} parent=1 // pred_fallthru
      _
    // Predicated region
    $region34: #{improved_nn_forward.1} parent=1 // pred_check
      _
    $region35: #{improved_nn_forward.1} parent=1 // pred_check_branch
      %77 = sbr.rel (0) target = $region37
    $region36: #{improved_nn_forward.1} parent=1 // pred_region
      _
    $region37: #{improved_nn_forward.1} parent=1 // pred_fallthru
      _
    // Predicated region
    $region38: #{improved_nn_forward.1} parent=1 // pred_check
      _
    $region39: #{improved_nn_forward.1} parent=1 // pred_check_branch
      %79 = sbr.rel (0) target = $region41
    $region40: #{improved_nn_forward.1} parent=1 // pred_region
      %81 = dma.done [#allocation4], 128
    $region41: #{improved_nn_forward.1} parent=1 // pred_fallthru
      _
    // Predicated region
    $region42: #{improved_nn_forward.1} parent=1 // pred_check
      _
    $region43: #{improved_nn_forward.1} parent=1 // pred_check_branch
      %83 = sbr.rel (0) target = $region45
    $region44: #{improved_nn_forward.1} parent=1 // pred_region
      %85 = dma.done [#allocation6], 512
    $region45: #{improved_nn_forward.1} parent=1 // pred_fallthru
      _
    // Predicated region
    $region46: #{improved_nn_forward.1} parent=1 // pred_check
      _
    $region47: #{improved_nn_forward.1} parent=1 // pred_check_branch
      %87 = sbr.rel (0) target = $region49
    $region48: #{improved_nn_forward.1} parent=1 // pred_region
      %89 = dma.done [#allocation6], 2048
    $region49: #{improved_nn_forward.1} parent=1 // pred_fallthru
      _
    // Predicated region
    $region50: #{improved_nn_forward.1} parent=1 // pred_check
      _
    $region51: #{improved_nn_forward.1} parent=1 // pred_check_branch
      %91 = sbr.rel (0) target = $region53
    $region52: #{improved_nn_forward.1} parent=1 // pred_region
      %93 = dma.done [#allocation9], 1024
    $region53: #{improved_nn_forward.1} parent=1 // pred_fallthru
      _
    %v95 = vld [vmem:[#allocation3] sm:$0xff]
    %v96 = vpack.c.bf16 %v95, %v95
    %v97 = vld [vmem:[#allocation5] sm:$0xff]
    %v98 = vld [vmem:[#allocation5 + $0x8] sm:$0xff]
    %v99 = vld [vmem:[#allocation5 + $0x10] sm:$0xff]
    %v100 = vld [vmem:[#allocation5 + $0x18] sm:$0xff]
    %v101 = vld [vmem:[%s2] sm:$0x3]
    %v103 = vperm.slane %v101, 0
    %v104 = vperm.slane %v101, 1
    %v111 = vunpack.c.l.b16 %v97
    %v112 = vunpack.c.h.b16 %v97
    %v113 = vunpack.c.l.b16 %v98
    %v114 = vunpack.c.h.b16 %v98
    %v115 = vunpack.c.l.b16 %v99
    %v116 = vunpack.c.h.b16 %v99
    %v117 = vunpack.c.l.b16 %v100
    %v118 = vunpack.c.h.b16 %v100
    %v119 = vpack.c.b16 %v113, %v111
    %v120 = vpack.c.b16 %v114, %v112
    %v121 = vpack.c.b16 %v117, %v115
    %v122 = vpack.c.b16 %v118, %v116
    %vm127 = vcmask 261120
    %v129 = vsel %vm127, %v96, 0
    %131 = vmatpush.bf16.msra.mxu0 0
    %132 = vmatpush.bf16.msra.mxu0 0
    %133 = vmatpush.bf16.msra.mxu0 0
    %134 = vmatpush.bf16.msra.mxu0 0
    %135 = vmatpush.bf16.msra.mxu0 0
    %136 = vmatpush.bf16.msra.mxu0 0
    %137 = vmatpush.bf16.msra.mxu0 %v121
    %138 = vmatpush.bf16.msra.mxu0 %v119
    %139 = vmatmul.bf16.gmra.mxu0 %v129
    %v140 = vpop.f32.mrf.mxu0
    %v141 = vadd.f32 %v103, %v140
    %v142 = vpop.f32.mrf.mxu0
    %143 = vdwg.mxu0
    %144 = vmatpush.bf16.msra.mxu0 0
    %145 = vmatpush.bf16.msra.mxu0 0
    %146 = vmatpush.bf16.msra.mxu0 0
    %147 = vmatpush.bf16.msra.mxu0 0
    %148 = vmatpush.bf16.msra.mxu0 0
    %149 = vmatpush.bf16.msra.mxu0 0
    %150 = vmatpush.bf16.msra.mxu0 %v122
    %151 = vmatpush.bf16.msra.mxu0 %v120
    %152 = vmatmul.bf16.gmra.mxu0 %v129
    %v153 = vpop.f32.mrf.mxu0
    %v154 = vadd.f32 %v104, %v153
    %v155 = vpop.f32.mrf.mxu0
    %156 = vdwg.mxu0
    %v157 = vmax.f32 %v141, 0.0
    %v158 = vmax.f32 %v154, 0.0
    %v159 = vpack.c.bf16 %v157, %v157
    %v160 = vpack.c.bf16 %v158, %v158
    %v161 = vld [vmem:[#allocation7] sm:$0xf]
    %v162 = vld [vmem:[#allocation7 + $0x4] sm:$0xf]
    %v163 = vld [vmem:[#allocation7 + $0x8] sm:$0xf]
    %v164 = vld [vmem:[#allocation7 + $0xc] sm:$0xf]
    %v165 = vld [vmem:[#allocation7 + $0x10] sm:$0xf]
    %v166 = vld [vmem:[#allocation7 + $0x14] sm:$0xf]
    %v167 = vld [vmem:[#allocation7 + $0x18] sm:$0xf]
    %v168 = vld [vmem:[#allocation7 + $0x1c] sm:$0xf]
    %v169 = vld [vmem:[#allocation7 + $0x20] sm:$0xf]
    %v170 = vld [vmem:[#allocation7 + $0x24] sm:$0xf]
    %v171 = vld [vmem:[#allocation7 + $0x28] sm:$0xf]
    %v172 = vld [vmem:[#allocation7 + $0x2c] sm:$0xf]
    %v173 = vld [vmem:[#allocation7 + $0x30] sm:$0xf]
    %v174 = vld [vmem:[#allocation7 + $0x34] sm:$0xf]
    %v175 = vld [vmem:[#allocation7 + $0x38] sm:$0xf]
    %v176 = vld [vmem:[#allocation7 + $0x3c] sm:$0xf]
    %v177 = vld [vmem:[#allocation7 + $0x40] sm:$0xf]
    %v178 = vld [vmem:[#allocation7 + $0x44] sm:$0xf]
    %v179 = vld [vmem:[#allocation7 + $0x48] sm:$0xf]
    %v180 = vld [vmem:[#allocation7 + $0x4c] sm:$0xf]
    %v181 = vld [vmem:[#allocation7 + $0x50] sm:$0xf]
    %v182 = vld [vmem:[#allocation7 + $0x54] sm:$0xf]
    %v183 = vld [vmem:[#allocation7 + $0x58] sm:$0xf]
    %v184 = vld [vmem:[#allocation7 + $0x5c] sm:$0xf]
    %v185 = vld [vmem:[#allocation7 + $0x60] sm:$0xf]
    %v186 = vld [vmem:[#allocation7 + $0x64] sm:$0xf]
    %v187 = vld [vmem:[#allocation7 + $0x68] sm:$0xf]
    %v188 = vld [vmem:[#allocation7 + $0x6c] sm:$0xf]
    %v189 = vld [vmem:[#allocation7 + $0x70] sm:$0xf]
    %v190 = vld [vmem:[#allocation7 + $0x74] sm:$0xf]
    %v191 = vld [vmem:[#allocation7 + $0x78] sm:$0xf]
    %v192 = vld [vmem:[#allocation7 + $0x7c] sm:$0xf]
    %v193 = vld [vmem:[%s4] sm:$0x1]
    %v195 = vperm.slane %v193, 0
    %v229 = vunpack.c.l.b16 %v161
    %v230 = vunpack.c.l.b16 %v162
    %v231 = vunpack.c.l.b16 %v163
    %v232 = vunpack.c.l.b16 %v164
    %v233 = vunpack.c.l.b16 %v165
    %v234 = vunpack.c.l.b16 %v166
    %v235 = vunpack.c.l.b16 %v167
    %v236 = vunpack.c.l.b16 %v168
    %v237 = vunpack.c.l.b16 %v169
    %v238 = vunpack.c.l.b16 %v170
    %v239 = vunpack.c.l.b16 %v171
    %v240 = vunpack.c.l.b16 %v172
    %v241 = vunpack.c.l.b16 %v173
    %v242 = vunpack.c.l.b16 %v174
    %v243 = vunpack.c.l.b16 %v175
    %v244 = vunpack.c.l.b16 %v176
    %v245 = vunpack.c.l.b16 %v177
    %v246 = vunpack.c.l.b16 %v178
    %v247 = vunpack.c.l.b16 %v179
    %v248 = vunpack.c.l.b16 %v180
    %v249 = vunpack.c.l.b16 %v181
    %v250 = vunpack.c.l.b16 %v182
    %v251 = vunpack.c.l.b16 %v183
    %v252 = vunpack.c.l.b16 %v184
    %v253 = vunpack.c.l.b16 %v185
    %v254 = vunpack.c.l.b16 %v186
    %v255 = vunpack.c.l.b16 %v187
    %v256 = vunpack.c.l.b16 %v188
    %v257 = vunpack.c.l.b16 %v189
    %v258 = vunpack.c.l.b16 %v190
    %v259 = vunpack.c.l.b16 %v191
    %v260 = vunpack.c.l.b16 %v192
    %v261 = vpack.c.b16 %v230, %v229
    %v262 = vpack.c.b16 %v232, %v231
    %v263 = vpack.c.b16 %v234, %v233
    %v264 = vpack.c.b16 %v236, %v235
    %v265 = vpack.c.b16 %v238, %v237
    %v266 = vpack.c.b16 %v240, %v239
    %v267 = vpack.c.b16 %v242, %v241
    %v268 = vpack.c.b16 %v244, %v243
    %v269 = vpack.c.b16 %v246, %v245
    %v270 = vpack.c.b16 %v248, %v247
    %v271 = vpack.c.b16 %v250, %v249
    %v272 = vpack.c.b16 %v252, %v251
    %v273 = vpack.c.b16 %v254, %v253
    %v274 = vpack.c.b16 %v256, %v255
    %v275 = vpack.c.b16 %v258, %v257
    %v276 = vpack.c.b16 %v260, %v259
    %293 = vmatpush.bf16.msra.mxu0 %v268
    %294 = vmatpush.bf16.msra.mxu0 %v267
    %295 = vmatpush.bf16.msra.mxu0 %v266
    %296 = vmatpush.bf16.msra.mxu0 %v265
    %297 = vmatpush.bf16.msra.mxu0 %v264
    %298 = vmatpush.bf16.msra.mxu0 %v263
    %299 = vmatpush.bf16.msra.mxu0 %v262
    %300 = vmatpush.bf16.msra.mxu0 %v261
    %301 = vmatmul.bf16.gmra.mxu0 %v159
    %v302 = vpop.f32.mrf.mxu0
    %v303 = vadd.f32 %v195, %v302
    %v304 = vpop.f32.mrf.mxu0
    %305 = vdwg.mxu0
    %306 = vmatpush.bf16.msra.mxu0 %v276
    %307 = vmatpush.bf16.msra.mxu0 %v275
    %308 = vmatpush.bf16.msra.mxu0 %v274
    %309 = vmatpush.bf16.msra.mxu0 %v273
    %310 = vmatpush.bf16.msra.mxu0 %v272
    %311 = vmatpush.bf16.msra.mxu0 %v271
    %312 = vmatpush.bf16.msra.mxu0 %v270
    %313 = vmatpush.bf16.msra.mxu0 %v269
    %314 = vmatmul.bf16.gmra.mxu0 %v160
    %v315 = vpop.f32.mrf.mxu0
    %v316 = vadd.f32 %v303, %v315
    %v317 = vpop.f32.mrf.mxu0
    %318 = vdwg.mxu0
    %v319 = vmax.f32 %v316, 0.0
    %v320 = vpack.c.bf16 %v319, %v319
    %v321 = vld [vmem:[#allocation8] sm:$0xf]
    %v322 = vld [vmem:[#allocation8 + $0x4] sm:$0xf]
    %v323 = vld [vmem:[#allocation8 + $0x8] sm:$0xf]
    %v324 = vld [vmem:[#allocation8 + $0xc] sm:$0xf]
    %v325 = vld [vmem:[#allocation8 + $0x10] sm:$0xf]
    %v326 = vld [vmem:[#allocation8 + $0x14] sm:$0xf]
    %v327 = vld [vmem:[#allocation8 + $0x18] sm:$0xf]
    %v328 = vld [vmem:[#allocation8 + $0x1c] sm:$0xf]
    %v329 = vld [vmem:[#allocation8 + $0x20] sm:$0xf]
    %v330 = vld [vmem:[#allocation8 + $0x24] sm:$0xf]
    %v331 = vld [vmem:[#allocation8 + $0x28] sm:$0xf]
    %v332 = vld [vmem:[#allocation8 + $0x2c] sm:$0xf]
    %v333 = vld [vmem:[#allocation8 + $0x30] sm:$0xf]
    %v334 = vld [vmem:[#allocation8 + $0x34] sm:$0xf]
    %v335 = vld [vmem:[#allocation8 + $0x38] sm:$0xf]
    %v336 = vld [vmem:[#allocation8 + $0x3c] sm:$0xf]
    %v337 = vld [vmem:[%s6] sm:$0x1]
    %v339 = vperm.slane %v337, 0
    %v357 = vunpack.c.l.b16 %v321
    %v358 = vunpack.c.l.b16 %v322
    %v359 = vunpack.c.l.b16 %v323
    %v360 = vunpack.c.l.b16 %v324
    %v361 = vunpack.c.l.b16 %v325
    %v362 = vunpack.c.l.b16 %v326
    %v363 = vunpack.c.l.b16 %v327
    %v364 = vunpack.c.l.b16 %v328
    %v365 = vunpack.c.l.b16 %v329
    %v366 = vunpack.c.l.b16 %v330
    %v367 = vunpack.c.l.b16 %v331
    %v368 = vunpack.c.l.b16 %v332
    %v369 = vunpack.c.l.b16 %v333
    %v370 = vunpack.c.l.b16 %v334
    %v371 = vunpack.c.l.b16 %v335
    %v372 = vunpack.c.l.b16 %v336
    %v373 = vpack.c.b16 %v358, %v357
    %v374 = vpack.c.b16 %v360, %v359
    %v375 = vpack.c.b16 %v362, %v361
    %v376 = vpack.c.b16 %v364, %v363
    %v377 = vpack.c.b16 %v366, %v365
    %v378 = vpack.c.b16 %v368, %v367
    %v379 = vpack.c.b16 %v370, %v369
    %v380 = vpack.c.b16 %v372, %v371
    %389 = vmatpush.bf16.msra.mxu0 %v380
    %390 = vmatpush.bf16.msra.mxu0 %v379
    %391 = vmatpush.bf16.msra.mxu0 %v378
    %392 = vmatpush.bf16.msra.mxu0 %v377
    %393 = vmatpush.bf16.msra.mxu0 %v376
    %394 = vmatpush.bf16.msra.mxu0 %v375
    %395 = vmatpush.bf16.msra.mxu0 %v374
    %396 = vmatpush.bf16.msra.mxu0 %v373
    %397 = vmatmul.bf16.gmra.mxu0 %v320
    %v398 = vpop.f32.mrf.mxu0
    %v399 = vadd.f32 %v339, %v398
    %v400 = vpop.f32.mrf.mxu0
    %401 = vdwg.mxu0
    %v402 = vmax.f32 %v399, 0.0
    %v403 = vld [vmem:[%s7] sm:$0x1]
    %v405 = vperm.slane %v403, 0
    %v407 = vmul.f32 %v402, %v405
    %408 = vadd.xlane.f32.xlu0 %v407
    %v409 = vpop.xlane.xlu0 %408
    %s410 = sld [smem:[#allocation2]]
    %v411 = vstv %s410
    %v412 = vadd.f32 %v409, %v411
    %vm413 = vcmask 7168
    %414 = vst.msk [vmem:[%s9] sm:$0xff] %vm413, %v412
    // Predicated region
    $region54: #{improved_nn_forward.1} parent=1 // pred_check
      _
    $region55: #{improved_nn_forward.1} parent=1 // pred_check_branch
      %416 = sbr.rel (0) target = $region57
    $region56: #{improved_nn_forward.1} parent=1 // pred_region
      _
    $region57: #{improved_nn_forward.1} parent=1 // pred_fallthru
      _
    // Predicated region
    $region58: #{improved_nn_forward.1} parent=1 // pred_check
      _
    $region59: #{improved_nn_forward.1} parent=1 // pred_check_branch
      %418 = sbr.rel (0) target = $region61
    $region60: #{improved_nn_forward.1} parent=1 // pred_region
      _
    $region61: #{improved_nn_forward.1} parent=1 // pred_fallthru
      _
    %419 = vsyncpa [#allocation4], 1
    %420 = vsyncpa [#allocation6], 1
    %421 = vsyncpa [#allocation9], 1

</llo_original>
